<compile_context>
chip_gen: v5e
topology: v5e:2x2
jax: 0.10.0
libtpu: 0.0.40
codegen_flags: <defaults>
</compile_context>

<pallas_src>
import functools

import jax
import jax.numpy as jnp
from jax.experimental import pallas as pl
from jax.experimental.pallas import tpu as pltpu


def _round_up(x, m):
    return (x + m - 1) // m * m


def _rotary_kernel(inv_ref, out_ref):
    # inv_ref : (1, H)         f32   (H = dim // 2), resident across all grid steps
    # out_ref : (TILE_T, 2H)   f32   cos in [:, :H], sin in [:, H:]
    tile_t, two_h = out_ref.shape
    h = two_h // 2
    # positions for this tile: program_id(0)*TILE_T + [0 .. TILE_T)
    base = pl.program_id(0) * tile_t
    t = (jax.lax.broadcasted_iota(jnp.int32, (tile_t, h), 0) + base).astype(jnp.float32)
    freqs = t * inv_ref[...]            # (TILE_T, H) == outer(t, inv_freq) for this tile
    out_ref[:, :h] = jnp.cos(freqs)
    out_ref[:, h:] = jnp.sin(freqs)


@functools.partial(jax.jit, static_argnums=(0,))
def _rotary_cache(T, inv_freq):
    """Returns (cos, sin) each of shape (T, H) in float32."""
    H = inv_freq.shape[0]
    # Tile T: multiple of 8 (sublane granularity), capped at 512 rows per tile
    # (measured pipelining sweet spot; bounded VMEM for v7x's 64 MiB).
    TILE_T = min(512, _round_up(max(T, 1), 8))
    grid = (pl.cdiv(T, TILE_T),)

    cost = pl.CostEstimate(
        flops=T * H,                      # the outer-product multiply
        transcendentals=2 * T * H,        # cos + sin
        bytes_accessed=2 * T * H * 4 + H * 4,
    )

    packed = pl.pallas_call(
        _rotary_kernel,
        out_shape=jax.ShapeDtypeStruct((T, 2 * H), jnp.float32),
        grid=grid,
        in_specs=[pl.BlockSpec((1, H), lambda i: (0, 0))],          # stays resident
        out_specs=pl.BlockSpec((TILE_T, 2 * H), lambda i: (i, 0)),  # lane-dense packed cos|sin
        compiler_params=pltpu.CompilerParams(
            dimension_semantics=("parallel",),                       # megacore sharding on v7x
        ),
        cost_estimate=cost,
    )(inv_freq.reshape(1, H).astype(jnp.float32))

    return packed[:, :H], packed[:, H:]


def make_inv_freq(dim, base=10000.0):
    # matches: 1.0 / base ** (torch.arange(0, dim, 2).float() / dim)
    return 1.0 / (base ** (jnp.arange(0, dim, 2, dtype=jnp.float32) / dim))


def rotary_forward(x, inv_freq):
    """Functional mirror of Rotary.forward: (cos, sin), each (1, T, 1, dim//2)."""
    T = x.shape[1]
    cos, sin = _rotary_cache(T, inv_freq)
    return cos[None, :, None, :], sin[None, :, None, :]


class Rotary:
    """Mirrors the PyTorch module, including the seq_len memoization."""

    def __init__(self, dim, base=10000.0):
        self.inv_freq = make_inv_freq(dim, base)
        self.seq_len_cached = None
        self.cos_cached = None
        self.sin_cached = None

    def __call__(self, x):
        seq_len = x.shape[1]
        if seq_len != self.seq_len_cached:
            self.seq_len_cached = seq_len
            self.cos_cached, self.sin_cached = _rotary_cache(seq_len, self.inv_freq)
        return (self.cos_cached[None, :, None, :],
                self.sin_cached[None, :, None, :])


if __name__ == "__main__":
    # deterministic "parameters" and inputs (small shapes)
    dim = 32                      # head_dim passed to Rotary(dim)
    B, T, n_heads = 2, 8, 4       # x: (batch, seq, heads, head_dim)

    key = jax.random.PRNGKey(0)
    x = jax.random.normal(key, (B, T, n_heads, dim), dtype=jnp.float32)

    rot = Rotary(dim)
    cos, sin = rot(x)
    # second call exercises the memo path (no kernel relaunch)
    cos, sin = rot(x)
    cos, sin = jax.block_until_ready((cos, sin))

    # reference check (plain JAX)
    inv_freq = make_inv_freq(dim)
    t = jnp.arange(T, dtype=jnp.float32)
    freqs_ref = jnp.outer(t, inv_freq)
    cos_ref = jnp.cos(freqs_ref)[None, :, None, :]
    sin_ref = jnp.sin(freqs_ref)[None, :, None, :]

    assert cos.shape == (1, T, 1, dim // 2), cos.shape
    assert sin.shape == (1, T, 1, dim // 2), sin.shape
    assert jnp.allclose(cos, cos_ref, atol=1e-5, rtol=1e-5)
    assert jnp.allclose(sin, sin_ref, atol=1e-5, rtol=1e-5)

    # also sanity-check a T that is not a multiple of the tile / 8 (ragged tail)
    T2 = 1000
    x2 = jax.random.normal(key, (1, T2, n_heads, dim), dtype=jnp.float32)
    cos2, sin2 = rotary_forward(x2, inv_freq)
    cos2, sin2 = jax.block_until_ready((cos2, sin2))
    t2 = jnp.arange(T2, dtype=jnp.float32)
    freqs2 = jnp.outer(t2, inv_freq)
    assert jnp.allclose(cos2[0, :, 0, :], jnp.cos(freqs2), atol=1e-5, rtol=1e-5)
    assert jnp.allclose(sin2[0, :, 0, :], jnp.sin(freqs2), atol=1e-5, rtol=1e-5)

    print("KERNEL_OK")
</pallas_src>

<mosaic_0001>
module attributes {stable_mosaic.version = 11 : i64} {
  func.func @_rotary_kernel(%arg0: i32, %arg1: memref<1x16xf32, #tpu.memory_space<vmem>>, %arg2: memref<8x32xf32, #tpu.memory_space<vmem>>) attributes {dimension_semantics = [#tpu.dimension_semantics<parallel>], iteration_bounds = array<i64: 1>, scalar_prefetch = 0 : i64, scratch_operands = 0 : i64, tpu.core_type = #tpu.core_type<tc>, window_params = [{pipeline_mode = #tpu.pipeline_mode<synchronous>, transform_indices = @transform_0, window_bounds = array<i64: 1, 16>}, {transform_indices = @transform_1, window_bounds = array<i64: 8, 32>}]} {
    %c8_i32 = arith.constant 8 : i32
    %0 = arith.muli %arg0, %c8_i32 : i32
    %1 = tpu.iota {dimensions = array<i32: 0>} : vector<8x16xi32>
    %2 = vector.broadcast %0 : i32 to vector<8x16xi32>
    %3 = arith.addi %1, %2 : vector<8x16xi32>
    %4 = arith.sitofp %3 : vector<8x16xi32> to vector<8x16xf32>
    %c0 = arith.constant 0 : index
    %c0_0 = arith.constant 0 : index
    %5 = vector.load %arg1[%c0, %c0_0] : memref<1x16xf32, #tpu.memory_space<vmem>>, vector<1x16xf32>
    %6 = vector.broadcast %5 : vector<1x16xf32> to vector<8x16xf32>
    %7 = arith.mulf %4, %6 : vector<8x16xf32>
    %8 = math.cos %7 : vector<8x16xf32>
    %c0_1 = arith.constant 0 : index
    %c0_2 = arith.constant 0 : index
    %9 = vector.load %arg2[%c0_1, %c0_2] : memref<8x32xf32, #tpu.memory_space<vmem>>, vector<8x16xf32>
    tpu.vector_store %arg2[%c0_1, %c0_2], %8 {strides = array<i32>} : memref<8x32xf32, #tpu.memory_space<vmem>>, vector<8x16xf32>,
    %10 = math.sin %7 : vector<8x16xf32>
    %c0_3 = arith.constant 0 : index
    %c16 = arith.constant 16 : index
    %11 = vector.load %arg2[%c0_3, %c16] : memref<8x32xf32, #tpu.memory_space<vmem>>, vector<8x16xf32>
    tpu.vector_store %arg2[%c0_3, %c16], %10 {strides = array<i32>} : memref<8x32xf32, #tpu.memory_space<vmem>>, vector<8x16xf32>,
    return
  }
  func.func @transform_0(%arg0: i32) -> (i32, i32) {
    %c0_i32 = arith.constant 0 : i32
    %c0_i32_0 = arith.constant 0 : i32
    %c0_i32_1 = arith.constant 0 : i32
    return %c0_i32, %c0_i32_0 : i32, i32
  }
  func.func @transform_1(%arg0: i32) -> (i32, i32) {
    %c0_i32 = arith.constant 0 : i32
    %c0_i32_0 = arith.constant 0 : i32
    return %arg0, %c0_i32 : i32, i32
  }
}

</mosaic_0001>

<llo_original>
// kernel: _rotary_cache.1
$region0: #{_rotary_cache.1}
  #allocation0 [shape = 'u32[]', space=smem, size = 0x4, offset = 0x4, fixed_abs, tag = 'smem constant byte address 0x4 - core index']
  #allocation1 [shape = 'u32[72,128]{1,0:T(1,128)}', space=vmem, size = 0x9000, scoped, tag = 'internal scratch']
  %s0 = inlined_call_operand.hbm [shape: f32[1,16], index: 0, kind: input, shape index: {}]
  %s1 = inlined_call_operand.vmem [shape: f32[8,32], index: 1, kind: output, shape index: {}]
  %s2 = sld [smem:[#allocation0]]
  $region18: #{_rotary_cache.1} parent=0
    _
  %s4 = ssub.s32 1, %s2
  %s5 = scalar_select 0, %s4, %s2
  $region1: #{_rotary_cache.1} parent=0
    #allocation2 [shape = 'u8[512]{0}', space=vmem, size = 0x400, scoped, tag = 'input window, operand 0, single buffered']
    #allocation3 [shape = 's32[1]{0}', space=sflag, size = 0x4, scoped, tag = 'scoped memory for _rotary_cache.1']
    %6 = vsyncpa [#allocation3], 0
    // Predicated region
    $region2: #{_rotary_cache.1} parent=1 // pred_check
      _
    $region3: #{_rotary_cache.1} parent=1 // pred_check_branch
      %8 = sbr.rel (0) target = $region5
    $region4: #{_rotary_cache.1} parent=1 // pred_region
      %10 = vsyncadd [#allocation3], 0
      %s12 = sshll.u32 %s0, 4
      %s13 = int_to_ptr.hbm [resolvable:$true] %s12
      %s14 = sshll.u32 [#allocation2], 4
      %s15 = int_to_ptr.vmem [resolvable:$true] %s14
      %17 = dma.hbm_to_vmem [thread:$0]  %s13, 16, %s15, [#allocation3]
    $region5: #{_rotary_cache.1} parent=1 // pred_fallthru
      _
    // Predicated region
    $region6: #{_rotary_cache.1} parent=1 // pred_check
      _
    $region7: #{_rotary_cache.1} parent=1 // pred_check_branch
      %19 = sbr.rel (0) target = $region9
    $region8: #{_rotary_cache.1} parent=1 // pred_region
      %21 = dma.done [#allocation3], 16
    $region9: #{_rotary_cache.1} parent=1 // pred_fallthru
      _
    %s22 = smul.u32 0, 8
    %v23 = vlaneseq
    %v24 = vshrl.u32 %v23, 7
    %v25 = vstv %s22
    %v26 = vadd.s32 %v24, %v25
    %v27 = vcvt.s32.f32 %v26
    %v28 = vld [vmem:[#allocation2] sm:$0x1]
    %v30 = vperm.slane %v28, 0
    %v32 = vmul.f32 %v27, %v30
    %v33 = vand.u32 2147483647, %v32
    %vm34 = vcmp.le.f32.partialorder %v33, 0.7853982
    %vm35 = vcmp.lt.s32.totalorder %v32, 0
    %v36 = vand.u32 %v32, 2139095040
    %v37 = vshrl.u32 %v36, 23
    %v38 = vsub.s32 %v37, 127
    %v39 = vand.u32 2147483647, %v32
    %v40 = vand.u32 %v39, 8388607
    %v41 = vor.u32 %v40, 8388608
    %v42 = vsub.s32 0, %v41
    %v43 = vadd.s32 %v38, 1
    %vm44 = vcmp.gt.s32.totalorder %v43, 0
    %v45 = vsel %vm44, %v43, 0
    %v46 = vshrl.u32 %v45, 5
    %v47 = vand.u32 %v45, 31
    %v48 = vsub.s32 32, %v47
    %v49 = vshrl.u32 683565275, %v48
    %v50 = vshll.u32 683565275, %v47
    %v51 = vshrl.u32 2475754826, %v48
    %v52 = vor.u32 %v50, %v51
    %v53 = vshll.u32 2475754826, %v47
    %v54 = vshrl.u32 2131351028, %v48
    %v55 = vor.u32 %v53, %v54
    %v56 = vshll.u32 2131351028, %v47
    %v57 = vshrl.u32 2102212464, %v48
    %v58 = vor.u32 %v56, %v57
    %v59 = vshll.u32 2102212464, %v47
    %v60 = vshrl.u32 920167782, %v48
    %v61 = vor.u32 %v59, %v60
    %v62 = vshll.u32 920167782, %v47
    %v63 = vshrl.u32 1326507024, %v48
    %v64 = vor.u32 %v62, %v63
    %vm65 = vcmp.lt.s32.totalorder %v46, 1
    %vm66 = vcmp.lt.s32.totalorder %v46, 2
    %vm67 = vcmp.lt.s32.totalorder %v46, 3
    %vm68 = vcmp.lt.s32.totalorder %v46, 4
    %v69 = vsel %vm65, %v49, %v52
    %v70 = vsel %vm68, %v58, 2102212464
    %v71 = vsel %vm67, %v55, %v70
    %v72 = vsel %vm66, %v69, %v71
    %v73 = vsel %vm65, %v52, %v55
    %v74 = vsel %vm68, %v61, 920167782
    %v75 = vsel %vm67, %v58, %v74
    %v76 = vsel %vm66, %v73, %v75
    %v77 = vsel %vm65, %v55, %v58
    %v78 = vsel %vm68, %v64, 1326507024
    %v79 = vsel %vm67, %v61, %v78
    %v80 = vsel %vm66, %v77, %v79
    %v81 = vshll.u32 %v41, 8
    %v82 = vand.u32 %v81, 65535
    %v83 = vshrl.u32 %v81, 16
    %v84 = vand.u32 %v80, 65535
    %v85 = vshrl.u32 %v80, 16
    %v86 = vmul.u32 %v82, %v84
    %v87 = vmul.u32 %v82, %v85
    %v88 = vmul.u32 %v83, %v84
    %v89 = vmul.u32 %v83, %v85
    %v90 = vshll.u32 %v87, 16
    %v91 = vshrl.u32 %v87, 16
    %v92 = vshll.u32 %v88, 16
    %v93 = vshrl.u32 %v88, 16
    %vm94 = vc.u32 %v86, %v90
    %v95 = vsel %vm94, 1, 0
    %v96 = vadd.s32 %v86, %v90
    %v97 = vadd.s32 %v89, %v95
    %vm98 = vc.u32 %v96, %v92
    %v99 = vsel %vm98, 1, 0
    %v100 = vadd.s32 %v96, %v92
    %v101 = vadd.s32 %v97, %v99
    %v102 = vadd.s32 %v101, %v91
    %v103 = vadd.s32 %v102, %v93
    %v104 = vand.u32 %v81, 65535
    %v105 = vshrl.u32 %v81, 16
    %v106 = vand.u32 %v76, 65535
    %v107 = vshrl.u32 %v76, 16
    %v108 = vmul.u32 %v104, %v106
    %v109 = vmul.u32 %v104, %v107
    %v110 = vmul.u32 %v105, %v106
    %v111 = vmul.u32 %v105, %v107
    %v112 = vshll.u32 %v109, 16
    %v113 = vshrl.u32 %v109, 16
    %v114 = vshll.u32 %v110, 16
    %v115 = vshrl.u32 %v110, 16
    %vm116 = vc.u32 %v108, %v112
    %v117 = vsel %vm116, 1, 0
    %v118 = vadd.s32 %v108, %v112
    %v119 = vadd.s32 %v111, %v117
    %vm120 = vc.u32 %v118, %v114
    %v121 = vsel %vm120, 1, 0
    %v122 = vadd.s32 %v118, %v114
    %v123 = vadd.s32 %v119, %v121
    %v124 = vadd.s32 %v123, %v113
    %v125 = vadd.s32 %v124, %v115
    %v126 = vmul.u32 %v81, %v72
    %v127 = vadd.s32 %v103, %v122
    %vm128 = vc.u32 %v103, %v122
    %v129 = vadd.s32 %v125, 1
    %v130 = vsel %vm128, %v129, %v125
    %v131 = vadd.s32 %v126, %v130
    %v132 = vadd.s32 %v131, 536870912
    %v133 = vshrl.u32 %v132, 30
    %v134 = vshll.u32 %v133, 30
    %v135 = vsub.s32 %v131, %v134
    %vm136 = vcmp.lt.s32.totalorder %v135, 0
    %v137 = vsub.s32 0, %v135
    %v138 = vsel %vm136, %v137, %v135
    %v139 = vclz %v138
    %v140 = vsub.s32 %v139, 2
    %vm141 = vcmp.gt.s32.totalorder 0, %v140
    %v142 = vsel %vm141, 0, %v140
    %v143 = vsub.s32 32, %v142
    %v144 = vshll.u32 %v135, %v142
    %v145 = vshrl.u32 %v127, %v143
    %v146 = vor.u32 %v144, %v145
    %v147 = vsub.s32 4294967266, %v142
    %v148 = vadd.s32 %v147, 127
    %v149 = vshll.u32 %v148, 23
    %v150 = vor.u32 4788187, %v149
    %v151 = vand.u32 2147483647, %v150
    %v153 = vcvt.s32.f32 %v146
    %v154 = vmul.f32 %v153, %v151
    %v155 = vxor.u32 %v154, 2147483648
    %v156 = vsel %vm35, %v155, %v154
    %v157 = vsub.s32 4, %v133
    %v158 = vsel %vm35, %v157, %v133
    %v159 = vsel %vm34, %v32, %v156
    %v160 = vsel %vm34, 0, %v158
    %v161 = vmul.f32 %v159, %v159
    %v162 = vmul.f32 %v161, -0.001358992
    %v163 = vadd.f32 %v162, 0.041655596
    %v164 = vmul.f32 %v161, %v163
    %v165 = vadd.f32 %v164, -0.4999988
    %v166 = vmul.f32 %v161, %v165
    %v167 = vadd.f32 1.0, %v166
    %v168 = vmul.f32 %v159, %v159
    %v169 = vmul.f32 %v168, -0.00019511016
    %v170 = vadd.f32 %v169, 0.008332121
    %v171 = vmul.f32 %v168, %v170
    %v172 = vadd.f32 %v171, -0.16666654
    %v173 = vmul.f32 %v168, %v172
    %v174 = vadd.f32 %v173, 1.0
    %v175 = vmul.f32 %v174, %v159
    %vm176 = vweird.f32 %v32
    %v177 = vand.u32 %v160, 3
    %vm178 = vcmp.lt.s32.totalorder %v177, 2
    %vm179 = vcmp.eq.s32.totalorder %v177, 0
    %v180 = vxor.u32 %v175, 2147483648
    %v181 = vsel %vm179, %v167, %v180
    %vm182 = vcmp.eq.s32.totalorder %v177, 2
    %v183 = vxor.u32 %v167, 2147483648
    %v184 = vsel %vm182, %v183, %v175
    %v185 = vsel %vm178, %v181, %v184
    %v186 = vsel %vm176, nan, %v185
    %vm187 = vcmask 130048
    %188 = vst.msk [vmem:[%s1] sm:$0xff] %vm187, %v186
    %v189 = vand.u32 2147483647, %v32
    %vm190 = vcmp.le.f32.partialorder %v189, 0.7853982
    %vm191 = vcmp.lt.s32.totalorder %v32, 0
    %v192 = vand.u32 %v32, 2139095040
    %v193 = vshrl.u32 %v192, 23
    %v194 = vsub.s32 %v193, 127
    %v195 = vand.u32 2147483647, %v32
    %v196 = vand.u32 %v195, 8388607
    %v197 = vor.u32 %v196, 8388608
    %v198 = vsub.s32 0, %v197
    %v199 = vadd.s32 %v194, 1
    %vm200 = vcmp.gt.s32.totalorder %v199, 0
    %v201 = vsel %vm200, %v199, 0
    %v202 = vshrl.u32 %v201, 5
    %v203 = vand.u32 %v201, 31
    %v204 = vsub.s32 32, %v203
    %v205 = vshrl.u32 683565275, %v204
    %v206 = vshll.u32 683565275, %v203
    %v207 = vshrl.u32 2475754826, %v204
    %v208 = vor.u32 %v206, %v207
    %v209 = vshll.u32 2475754826, %v203
    %v210 = vshrl.u32 2131351028, %v204
    %v211 = vor.u32 %v209, %v210
    %v212 = vshll.u32 2131351028, %v203
    %v213 = vshrl.u32 2102212464, %v204
    %v214 = vor.u32 %v212, %v213
    %v215 = vshll.u32 2102212464, %v203
    %v216 = vshrl.u32 920167782, %v204
    %v217 = vor.u32 %v215, %v216
    %v218 = vshll.u32 920167782, %v203
    %v219 = vshrl.u32 1326507024, %v204
    %v220 = vor.u32 %v218, %v219
    %vm221 = vcmp.lt.s32.totalorder %v202, 1
    %vm222 = vcmp.lt.s32.totalorder %v202, 2
    %vm223 = vcmp.lt.s32.totalorder %v202, 3
    %vm224 = vcmp.lt.s32.totalorder %v202, 4
    %v225 = vsel %vm221, %v205, %v208
    %v226 = vsel %vm224, %v214, 2102212464
    %v227 = vsel %vm223, %v211, %v226
    %v228 = vsel %vm222, %v225, %v227
    %v229 = vsel %vm221, %v208, %v211
    %v230 = vsel %vm224, %v217, 920167782
    %v231 = vsel %vm223, %v214, %v230
    %v232 = vsel %vm222, %v229, %v231
    %v233 = vsel %vm221, %v211, %v214
    %v234 = vsel %vm224, %v220, 1326507024
    %v235 = vsel %vm223, %v217, %v234
    %v236 = vsel %vm222, %v233, %v235
    %v237 = vshll.u32 %v197, 8
    %v238 = vand.u32 %v237, 65535
    %v239 = vshrl.u32 %v237, 16
    %v240 = vand.u32 %v236, 65535
    %v241 = vshrl.u32 %v236, 16
    %v242 = vmul.u32 %v238, %v240
    %v243 = vmul.u32 %v238, %v241
    %v244 = vmul.u32 %v239, %v240
    %v245 = vmul.u32 %v239, %v241
    %v246 = vshll.u32 %v243, 16
    %v247 = vshrl.u32 %v243, 16
    %v248 = vshll.u32 %v244, 16
    %v249 = vshrl.u32 %v244, 16
    %vm250 = vc.u32 %v242, %v246
    %v251 = vsel %vm250, 1, 0
    %v252 = vadd.s32 %v242, %v246
    %v253 = vadd.s32 %v245, %v251
    %vm254 = vc.u32 %v252, %v248
    %v255 = vsel %vm254, 1, 0
    %v256 = vadd.s32 %v252, %v248
    %v257 = vadd.s32 %v253, %v255
    %v258 = vadd.s32 %v257, %v247
    %v259 = vadd.s32 %v258, %v249
    %v260 = vand.u32 %v237, 65535
    %v261 = vshrl.u32 %v237, 16
    %v262 = vand.u32 %v232, 65535
    %v263 = vshrl.u32 %v232, 16
    %v264 = vmul.u32 %v260, %v262
    %v265 = vmul.u32 %v260, %v263
    %v266 = vmul.u32 %v261, %v262
    %v267 = vmul.u32 %v261, %v263
    %v268 = vshll.u32 %v265, 16
    %v269 = vshrl.u32 %v265, 16
    %v270 = vshll.u32 %v266, 16
    %v271 = vshrl.u32 %v266, 16
    %vm272 = vc.u32 %v264, %v268
    %v273 = vsel %vm272, 1, 0
    %v274 = vadd.s32 %v264, %v268
    %v275 = vadd.s32 %v267, %v273
    %vm276 = vc.u32 %v274, %v270
    %v277 = vsel %vm276, 1, 0
    %v278 = vadd.s32 %v274, %v270
    %v279 = vadd.s32 %v275, %v277
    %v280 = vadd.s32 %v279, %v269
    %v281 = vadd.s32 %v280, %v271
    %v282 = vmul.u32 %v237, %v228
    %v283 = vadd.s32 %v259, %v278
    %vm284 = vc.u32 %v259, %v278
    %v285 = vadd.s32 %v281, 1
    %v286 = vsel %vm284, %v285, %v281
    %v287 = vadd.s32 %v282, %v286
    %v288 = vadd.s32 %v287, 536870912
    %v289 = vshrl.u32 %v288, 30
    %v290 = vshll.u32 %v289, 30
    %v291 = vsub.s32 %v287, %v290
    %vm292 = vcmp.lt.s32.totalorder %v291, 0
    %v293 = vsub.s32 0, %v291
    %v294 = vsel %vm292, %v293, %v291
    %v295 = vclz %v294
    %v296 = vsub.s32 %v295, 2
    %vm297 = vcmp.gt.s32.totalorder 0, %v296
    %v298 = vsel %vm297, 0, %v296
    %v299 = vsub.s32 32, %v298
    %v300 = vshll.u32 %v291, %v298
    %v301 = vshrl.u32 %v283, %v299
    %v302 = vor.u32 %v300, %v301
    %v303 = vsub.s32 4294967266, %v298
    %v304 = vadd.s32 %v303, 127
    %v305 = vshll.u32 %v304, 23
    %v306 = vor.u32 4788187, %v305
    %v307 = vand.u32 2147483647, %v306
    %v309 = vcvt.s32.f32 %v302
    %v310 = vmul.f32 %v309, %v307
    %v311 = vxor.u32 %v310, 2147483648
    %v312 = vsel %vm191, %v311, %v310
    %v313 = vsub.s32 4, %v289
    %v314 = vsel %vm191, %v313, %v289
    %v315 = vsel %vm190, %v32, %v312
    %v316 = vsel %vm190, 0, %v314
    %v317 = vmul.f32 %v315, %v315
    %v318 = vmul.f32 %v317, -0.001358992
    %v319 = vadd.f32 %v318, 0.041655596
    %v320 = vmul.f32 %v317, %v319
    %v321 = vadd.f32 %v320, -0.4999988
    %v322 = vmul.f32 %v317, %v321
    %v323 = vadd.f32 1.0, %v322
    %v324 = vmul.f32 %v315, %v315
    %v325 = vmul.f32 %v324, -0.00019511016
    %v326 = vadd.f32 %v325, 0.008332121
    %v327 = vmul.f32 %v324, %v326
    %v328 = vadd.f32 %v327, -0.16666654
    %v329 = vmul.f32 %v324, %v328
    %v330 = vadd.f32 %v329, 1.0
    %v331 = vmul.f32 %v330, %v315
    %vm332 = vweird.f32 %v32
    %v333 = vadd.s32 %v316, 3
    %v334 = vand.u32 %v333, 3
    %vm335 = vcmp.lt.s32.totalorder %v334, 2
    %vm336 = vcmp.eq.s32.totalorder %v334, 0
    %v337 = vxor.u32 %v331, 2147483648
    %v338 = vsel %vm336, %v323, %v337
    %vm339 = vcmp.eq.s32.totalorder %v334, 2
    %v340 = vxor.u32 %v323, 2147483648
    %v341 = vsel %vm339, %v340, %v331
    %v342 = vsel %vm335, %v338, %v341
    %v343 = vsel %vm332, nan, %v342
    %345 = vrot.lane.b32.xlu0 %v343, 16
    %v346 = vpop.permute.xlu0 %345
    %vm348 = vcmask 261248
    %349 = vst.msk [vmem:[%s1] sm:$0xff] %vm348, %v346
    // Predicated region
    $region10: #{_rotary_cache.1} parent=1 // pred_check
      _
    $region11: #{_rotary_cache.1} parent=1 // pred_check_branch
      %351 = sbr.rel (0) target = $region13
    $region12: #{_rotary_cache.1} parent=1 // pred_region
      _
    $region13: #{_rotary_cache.1} parent=1 // pred_fallthru
      _
    // Predicated region
    $region14: #{_rotary_cache.1} parent=1 // pred_check
      _
    $region15: #{_rotary_cache.1} parent=1 // pred_check_branch
      %353 = sbr.rel (0) target = $region17
    $region16: #{_rotary_cache.1} parent=1 // pred_region
      _
    $region17: #{_rotary_cache.1} parent=1 // pred_fallthru
      _
    %354 = vsyncpa [#allocation3], 1

</llo_original>
